<compile_context>
chip_gen: v7x
topology: tpu7x:2x2x1
jax: 0.10.0
libtpu: 0.0.40
codegen_flags: <defaults>
</compile_context>

<pallas_src>
import jax
import jax.numpy as jnp
from jax.experimental import pallas as pl
from jax.experimental.pallas import tpu as pltpu


def _weightd_whole_kernel(x_ref, w_ref, o_ref):
    # x_ref: (K, J, N), w_ref: (K, N), o_ref: (K, N, J) -- all fully in VMEM.
    for k in range(x_ref.shape[0]):        # K is tiny (2) and static: unrolled.
        # out[k, i, j] = x[k, j, i] * w[k, i]
        # Scale in x's layout (sublane-broadcast of w: cheap), then transpose.
        o_ref[k] = (x_ref[k] * w_ref[k][None, :]).T


def _weightd_tile_kernel(x_ref, w_ref, o_ref):
    # x_ref: (1, tj, tn), w_ref: (1, tn), o_ref: (1, tn, tj)
    # VPU scale in the source layout (w broadcast along sublanes), then the
    # XLU transpose; both are hidden under the tile DMAs -> DMA-bound.
    o_ref[0] = (x_ref[0] * w_ref[0][None, :]).T


def _weightd_small(x, w):
    K, J, N = x.shape
    return pl.pallas_call(
        _weightd_whole_kernel,
        out_shape=jax.ShapeDtypeStruct((K, N, J), x.dtype),
        in_specs=[
            pl.BlockSpec(memory_space=pltpu.MemorySpace.VMEM),
            pl.BlockSpec(memory_space=pltpu.MemorySpace.VMEM),
        ],
        out_specs=pl.BlockSpec(memory_space=pltpu.MemorySpace.VMEM),
    )(x, w)


def _weightd_tiled(x, w, tj, tn):
    K, J, N = x.shape
    # A tile dim is either the full array dim (always layout-legal) or a
    # multiple of 128 (legal as the lane dim of x / out and as a sublane dim).
    tj = J if J <= tj else max(128, (tj // 128) * 128)
    tn = N if N <= tn else max(128, (tn // 128) * 128)
    nb = pl.cdiv(N, tn)
    jb = pl.cdiv(J, tj)

    # Pad weight along N to a whole number of tiles so every (1, tn) weight
    # block is fully in bounds (weight is only K*N floats -- the pad is free).
    n_pad = nb * tn - N
    if n_pad:
        w = jnp.pad(w, ((0, 0), (0, n_pad)))

    return pl.pallas_call(
        _weightd_tile_kernel,
        out_shape=jax.ShapeDtypeStruct((K, N, J), x.dtype),
        grid=(K, nb, jb),
        in_specs=[
            pl.BlockSpec((1, tj, tn), lambda k, n, j: (k, j, n)),
            pl.BlockSpec((1, tn), lambda k, n, j: (k, n)),
        ],
        out_specs=pl.BlockSpec((1, tn, tj), lambda k, n, j: (k, n, j)),
        compiler_params=pltpu.CompilerParams(
            # No carried state across any axis -> all parallel (no-op on the
            # single-TC v5e/v6e, lets v7x's two TensorCores split the grid).
            dimension_semantics=("parallel", "parallel", "parallel"),
        ),
    )(x, w)


def weightd(x, w, *, tj=512, tn=512):
    """out = einsum('kji,ki->kij', x, w);  x: (K, J, N), w: (K, N) -> (K, N, J).

    tj / tn are tile targets for the J / N axes on large problems (rounded to
    multiples of 128; 512x512 f32 tiles are VMEM-safe on every TPU generation
    including v7x, and keep output stores lane-dense/unmasked).
    """
    K, J, N = x.shape
    assert w.shape == (K, N), (w.shape, (K, N))
    if w.dtype != x.dtype:
        w = w.astype(x.dtype)
    # Whole problem comfortably resident in VMEM -> skip the grid entirely.
    if K * J * N * x.dtype.itemsize <= 4 * 1024 * 1024:
        return _weightd_small(x, w)
    return _weightd_tiled(x, w, tj, tn)


if __name__ == "__main__":
    k1, k2, k3, k4 = jax.random.split(jax.random.PRNGKey(0), 4)

    # --- module-native sizes: K = 2 (fixed by the module), output_nodes = 32 ---
    K, J, N = 2, 16, 32
    x_small = jax.random.normal(k1, (K, J, N), dtype=jnp.float32)
    w_small = jax.random.uniform(k2, (K, N), dtype=jnp.float32,
                                 minval=-1.0, maxval=1.0)
    out_small = jax.block_until_ready(weightd(x_small, w_small))
    ref_small = jnp.einsum('kji,ki->kij', x_small, w_small)
    assert out_small.shape == (K, N, J)
    assert jnp.allclose(out_small, ref_small, atol=1e-6, rtol=1e-6)

    # --- exercise the tiled streaming path (ragged edges in both J and N) ---
    Jt, Nt = 300, 200
    x_big = jax.random.normal(k3, (K, Jt, Nt), dtype=jnp.float32)
    w_big = jax.random.uniform(k4, (K, Nt), dtype=jnp.float32,
                               minval=-1.0, maxval=1.0)
    out_big = jax.block_until_ready(_weightd_tiled(x_big, w_big, tj=128, tn=128))
    ref_big = jnp.einsum('kji,ki->kij', x_big, w_big)
    assert out_big.shape == (K, Nt, Jt)
    assert jnp.allclose(out_big, ref_big, atol=1e-6, rtol=1e-6)

    print("KERNEL_OK")
</pallas_src>

<mosaic_0001>
module attributes {stable_mosaic.version = 11 : i64} {
  func.func @_weightd_whole_kernel(%arg0: memref<2x16x32xf32, #tpu.memory_space<vmem>>, %arg1: memref<2x32xf32, #tpu.memory_space<vmem>>, %arg2: memref<2x32x16xf32, #tpu.memory_space<vmem>>) attributes {dimension_semantics = [], scalar_prefetch = 0 : i64, scratch_operands = 0 : i64, tpu.core_type = #tpu.core_type<tc>} {
    %c0 = arith.constant 0 : index
    %c0_0 = arith.constant 0 : index
    %c0_1 = arith.constant 0 : index
    %0 = vector.load %arg0[%c0, %c0_0, %c0_1] : memref<2x16x32xf32, #tpu.memory_space<vmem>>, vector<1x16x32xf32>
    %1 = vector.shape_cast %0 : vector<1x16x32xf32> to vector<16x32xf32>
    %c0_2 = arith.constant 0 : index
    %c0_3 = arith.constant 0 : index
    %2 = vector.load %arg1[%c0_2, %c0_3] : memref<2x32xf32, #tpu.memory_space<vmem>>, vector<1x32xf32>
    %3 = vector.shape_cast %2 : vector<1x32xf32> to vector<32xf32>
    %4 = vector.shape_cast %3 : vector<32xf32> to vector<1x32xf32>
    %5 = vector.broadcast %4 : vector<1x32xf32> to vector<16x32xf32>
    %6 = arith.mulf %1, %5 : vector<16x32xf32>
    %7 = tpu.transpose %6, [1, 0] : vector<16x32xf32> -> vector<32x16xf32>
    %c0_4 = arith.constant 0 : index
    %c0_5 = arith.constant 0 : index
    %c0_6 = arith.constant 0 : index
    %8 = vector.load %arg2[%c0_4, %c0_5, %c0_6] : memref<2x32x16xf32, #tpu.memory_space<vmem>>, vector<1x32x16xf32>
    %9 = vector.shape_cast %8 : vector<1x32x16xf32> to vector<32x16xf32>
    %10 = vector.shape_cast %7 : vector<32x16xf32> to vector<1x32x16xf32>
    tpu.vector_store %arg2[%c0_4, %c0_5, %c0_6], %10 {strides = array<i32>} : memref<2x32x16xf32, #tpu.memory_space<vmem>>, vector<1x32x16xf32>,
    %c1 = arith.constant 1 : index
    %c0_7 = arith.constant 0 : index
    %c0_8 = arith.constant 0 : index
    %11 = vector.load %arg0[%c1, %c0_7, %c0_8] : memref<2x16x32xf32, #tpu.memory_space<vmem>>, vector<1x16x32xf32>
    %12 = vector.shape_cast %11 : vector<1x16x32xf32> to vector<16x32xf32>
    %c1_9 = arith.constant 1 : index
    %c0_10 = arith.constant 0 : index
    %13 = vector.load %arg1[%c1_9, %c0_10] : memref<2x32xf32, #tpu.memory_space<vmem>>, vector<1x32xf32>
    %14 = vector.shape_cast %13 : vector<1x32xf32> to vector<32xf32>
    %15 = vector.shape_cast %14 : vector<32xf32> to vector<1x32xf32>
    %16 = vector.broadcast %15 : vector<1x32xf32> to vector<16x32xf32>
    %17 = arith.mulf %12, %16 : vector<16x32xf32>
    %18 = tpu.transpose %17, [1, 0] : vector<16x32xf32> -> vector<32x16xf32>
    %c1_11 = arith.constant 1 : index
    %c0_12 = arith.constant 0 : index
    %c0_13 = arith.constant 0 : index
    %19 = vector.load %arg2[%c1_11, %c0_12, %c0_13] : memref<2x32x16xf32, #tpu.memory_space<vmem>>, vector<1x32x16xf32>
    %20 = vector.shape_cast %19 : vector<1x32x16xf32> to vector<32x16xf32>
    %21 = vector.shape_cast %18 : vector<32x16xf32> to vector<1x32x16xf32>
    tpu.vector_store %arg2[%c1_11, %c0_12, %c0_13], %21 {strides = array<i32>} : memref<2x32x16xf32, #tpu.memory_space<vmem>>, vector<1x32x16xf32>,
    return
  }
}

</mosaic_0001>

<llo_original>
// kernel: tpu_custom_call.1
$region0: #{tpu_custom_call.1}
  #allocation0 [shape = 'u32[]', space=smem, size = 0x4, offset = 0x4, fixed_abs, tag = 'smem constant byte address 0x4 - core index']
  #allocation1 [shape = 'u32[144,128]{1,0:T(1,128)}', space=vmem, size = 0x12000, scoped, tag = 'internal scratch']
  %s0 = inlined_call_operand.hbm [shape: f32[2,16,32], index: 0, kind: input, shape index: {}]
  %s1 = inlined_call_operand.vmem [shape: f32[2,32], index: 1, kind: input, shape index: {}]
  %s2 = inlined_call_operand.vmem [shape: f32[2,32,16], index: 2, kind: output, shape index: {}]
  %s3 = sld [smem:[#allocation0]]
  $region22: #{tpu_custom_call.1} parent=0
    _
  %s5 = ssub.s32 1, %s3
  %s6 = scalar_select 0, %s5, %s3
  $region1: #{tpu_custom_call.1} parent=0
    #allocation2 [shape = 'u8[16384]{0}', space=vmem, size = 0x4000, scoped, tag = 'input window, operand 0, single buffered']
    #allocation3 [shape = 's32[1]{0}', space=sflag, size = 0x4, scoped, tag = 'scoped memory for tpu_custom_call.1']
    %7 = vsyncpa [#allocation3], 0
    // Predicated region
    $region2: #{tpu_custom_call.1} parent=1 // pred_check
      _
    $region3: #{tpu_custom_call.1} parent=1 // pred_check_branch
      %9 = sbr.rel (0) target = $region5
    $region4: #{tpu_custom_call.1} parent=1 // pred_region
      %s11 = ssub.s32 512, 512
      %12 = vsyncadd [#allocation3], %s11
      %s13 = sshll.u32 [#allocation2], 4
      %s14 = int_to_ptr.vmem [resolvable:$true] %s13
      %19 = dma.hbm_to_vmem [thread:$0]  %s0, 512, %s14, [#allocation3], 128, 128, 8
    $region5: #{tpu_custom_call.1} parent=1 // pred_fallthru
      _
    // Predicated region
    $region6: #{tpu_custom_call.1} parent=1 // pred_check
      _
    $region7: #{tpu_custom_call.1} parent=1 // pred_check_branch
      %21 = sbr.rel (0) target = $region9
    $region8: #{tpu_custom_call.1} parent=1 // pred_region
      _
    $region9: #{tpu_custom_call.1} parent=1 // pred_fallthru
      _
    // Predicated region
    $region10: #{tpu_custom_call.1} parent=1 // pred_check
      _
    $region11: #{tpu_custom_call.1} parent=1 // pred_check_branch
      %23 = sbr.rel (0) target = $region13
    $region12: #{tpu_custom_call.1} parent=1 // pred_region
      %24 = dma.done [#allocation3], 512
    $region13: #{tpu_custom_call.1} parent=1 // pred_fallthru
      _
    %v25 = vld [vmem:[#allocation2] sm:$0xff]
    %v26 = vld [vmem:[#allocation2 + $0x8] sm:$0xff]
    %v27 = vld [vmem:[%s1] sm:$0x1]
    %v28 = vlaneseq
    %v29 = vshrl.u32 %v28, 7
    %v30 = vsub.s32 0, %v29
    %v31 = vrot.slane %v27, %v30
    %v32 = vmul.f32 %v25, %v31
    %v33 = vmul.f32 %v26, %v31
    %34 = vxpose.xlu0.b32.start [1/16] %v32, 128
    %35 = vxpose.xlu0.b32.cont [2/16] %v33, 128
    %36 = vxpose.xlu0.b32.cont [3/16] 0.0, 128
    %37 = vxpose.xlu0.b32.cont [4/16] 0.0, 128
    %38 = vxpose.xlu0.b32.cont [5/16] 0.0, 128
    %39 = vxpose.xlu0.b32.cont [6/16] 0.0, 128
    %40 = vxpose.xlu0.b32.cont [7/16] 0.0, 128
    %41 = vxpose.xlu0.b32.cont [8/16] 0.0, 128
    %42 = vxpose.xlu0.b32.cont [9/16] 0.0, 128
    %43 = vxpose.xlu0.b32.cont [10/16] 0.0, 128
    %44 = vxpose.xlu0.b32.cont [11/16] 0.0, 128
    %45 = vxpose.xlu0.b32.cont [12/16] 0.0, 128
    %46 = vxpose.xlu0.b32.cont [13/16] 0.0, 128
    %47 = vxpose.xlu0.b32.cont [14/16] 0.0, 128
    %48 = vxpose.xlu0.b32.cont [15/16] 0.0, 128
    %49 = vxpose.xlu0.b32.end [16/16] 0.0, 128
    %v50 = vpop.trf.xlu0
    %v51 = vpop.trf.xlu0
    %v52 = vpop.trf.xlu0
    %v53 = vpop.trf.xlu0
    %v54 = vpop.trf.xlu0
    %v55 = vpop.trf.xlu0
    %v56 = vpop.trf.xlu0
    %v57 = vpop.trf.xlu0
    %v58 = vpop.trf.xlu0
    %v59 = vpop.trf.xlu0
    %v60 = vpop.trf.xlu0
    %v61 = vpop.trf.xlu0
    %v62 = vpop.trf.xlu0
    %v63 = vpop.trf.xlu0
    %v64 = vpop.trf.xlu0
    %v65 = vpop.trf.xlu0
    %vm66 = vcmask 130048
    %67 = vst.msk [vmem:[%s2] sm:$0xff] %vm66, %v50
    %68 = vst.msk [vmem:[%s2 + $0x8] sm:$0xff] %vm66, %v51
    %69 = vst.msk [vmem:[%s2 + $0x10] sm:$0xff] %vm66, %v52
    %70 = vst.msk [vmem:[%s2 + $0x18] sm:$0xff] %vm66, %v53
    %s71 = scalar_lea.vmem [#allocation2], 16
    %v72 = vld [vmem:[%s71] sm:$0xff]
    %v73 = vld [vmem:[%s71 + $0x8] sm:$0xff]
    %v74 = vld [vmem:[%s1 + $0x1] sm:$0x1]
    %v75 = vlaneseq
    %v76 = vshrl.u32 %v75, 7
    %v77 = vsub.s32 0, %v76
    %v78 = vrot.slane %v74, %v77
    %v79 = vmul.f32 %v72, %v78
    %v80 = vmul.f32 %v73, %v78
    %81 = vxpose.xlu0.b32.start [1/16] %v79, 128
    %82 = vxpose.xlu0.b32.cont [2/16] %v80, 128
    %83 = vxpose.xlu0.b32.cont [3/16] 0.0, 128
    %84 = vxpose.xlu0.b32.cont [4/16] 0.0, 128
    %85 = vxpose.xlu0.b32.cont [5/16] 0.0, 128
    %86 = vxpose.xlu0.b32.cont [6/16] 0.0, 128
    %87 = vxpose.xlu0.b32.cont [7/16] 0.0, 128
    %88 = vxpose.xlu0.b32.cont [8/16] 0.0, 128
    %89 = vxpose.xlu0.b32.cont [9/16] 0.0, 128
    %90 = vxpose.xlu0.b32.cont [10/16] 0.0, 128
    %91 = vxpose.xlu0.b32.cont [11/16] 0.0, 128
    %92 = vxpose.xlu0.b32.cont [12/16] 0.0, 128
    %93 = vxpose.xlu0.b32.cont [13/16] 0.0, 128
    %94 = vxpose.xlu0.b32.cont [14/16] 0.0, 128
    %95 = vxpose.xlu0.b32.cont [15/16] 0.0, 128
    %96 = vxpose.xlu0.b32.end [16/16] 0.0, 128
    %v97 = vpop.trf.xlu0
    %v98 = vpop.trf.xlu0
    %v99 = vpop.trf.xlu0
    %v100 = vpop.trf.xlu0
    %v101 = vpop.trf.xlu0
    %v102 = vpop.trf.xlu0
    %v103 = vpop.trf.xlu0
    %v104 = vpop.trf.xlu0
    %v105 = vpop.trf.xlu0
    %v106 = vpop.trf.xlu0
    %v107 = vpop.trf.xlu0
    %v108 = vpop.trf.xlu0
    %v109 = vpop.trf.xlu0
    %v110 = vpop.trf.xlu0
    %v111 = vpop.trf.xlu0
    %v112 = vpop.trf.xlu0
    %s113 = scalar_lea.vmem %s2, 32
    %114 = vst.msk [vmem:[%s113] sm:$0xff] %vm66, %v97
    %115 = vst.msk [vmem:[%s113 + $0x8] sm:$0xff] %vm66, %v98
    %116 = vst.msk [vmem:[%s113 + $0x10] sm:$0xff] %vm66, %v99
    %117 = vst.msk [vmem:[%s113 + $0x18] sm:$0xff] %vm66, %v100
    // Predicated region
    $region14: #{tpu_custom_call.1} parent=1 // pred_check
      _
    $region15: #{tpu_custom_call.1} parent=1 // pred_check_branch
      %119 = sbr.rel (0) target = $region17
    $region16: #{tpu_custom_call.1} parent=1 // pred_region
      _
    $region17: #{tpu_custom_call.1} parent=1 // pred_fallthru
      _
    // Predicated region
    $region18: #{tpu_custom_call.1} parent=1 // pred_check
      _
    $region19: #{tpu_custom_call.1} parent=1 // pred_check_branch
      %121 = sbr.rel (0) target = $region21
    $region20: #{tpu_custom_call.1} parent=1 // pred_region
      _
    $region21: #{tpu_custom_call.1} parent=1 // pred_fallthru
      _
    %122 = vsyncpa [#allocation3], 1

</llo_original>
